<compile_context>
chip_gen: v7x
topology: tpu7x:2x2x1
jax: 0.10.0
libtpu: 0.0.40
codegen_flags: <defaults>
</compile_context>

<pallas_src>
import jax
import jax.numpy as jnp
from jax.experimental import pallas as pl
from jax.experimental.pallas import tpu as pltpu


def positional_encoding(length, depth):
    # Mirrors the torch helper: depth/2 sin terms concatenated with depth/2 cos terms.
    half = depth // 2
    positions = jnp.arange(length, dtype=jnp.float32)[:, None]           # (L, 1)
    depths = jnp.arange(half, dtype=jnp.float32)[None, :] / float(half)  # (1, half)
    angle_rates = 1.0 / (10000.0 ** depths)                              # (1, half)
    angle_rads = positions * angle_rates                                  # (L, half)
    return jnp.concatenate([jnp.sin(angle_rads), jnp.cos(angle_rads)], axis=-1)  # (L, depth)


def _pos_embed_kernel(x_ref, w_ref, pe_ref, y_ref):
    # x_ref : (tile_s, d_in)     input rows (batch dim squeezed out)
    # w_ref : (d_in, d_model)    linear weight, pre-scaled by sqrt(d_model)
    # pe_ref: (tile_s, d_model)  positional encoding with bias*sqrt(d_model) folded in
    # y_ref : (tile_s, d_model)  output tile (lane-dense: d_model multiple of 128)
    d_in = x_ref.shape[1]
    x = x_ref[...]
    w = w_ref[...]

    if d_in > 64:
        # Large contraction: use the MXU.
        acc = jnp.dot(x, w, preferred_element_type=jnp.float32)
    else:
        # Tiny contraction (d_in = 1 here): unrolled VPU broadcast-mul-accumulate,
        # initialized with the first term (no zero-materialization pass).
        acc = x[:, 0:1] * w[0:1, :]
        for i in range(1, d_in):
            acc = acc + x[:, i:i + 1] * w[i:i + 1, :]

    y_ref[...] = (acc + pe_ref[...]).astype(y_ref.dtype)


def _choose_row_tile(S):
    if S <= 1024:
        return S
    for t in (1024, 512, 256, 128, 64, 32, 16, 8):
        if S % t == 0:
            return t
    # TODO(synk): ragged S > 1024 with no multiple-of-8 divisor -> single tile.
    return S


def positional_embedding_forward(x, weight_t, bias, pos_encoding):
    """x: (B, S, d_in); weight_t: (d_in, d_model) == PyTorch weight.T;
    bias: (d_model,); pos_encoding: (max_len, d_model)  ->  (B, S, d_model)."""
    B, S, d_in = x.shape
    d_in_w, d_model = weight_t.shape
    assert d_in == d_in_w
    assert pos_encoding.shape[0] >= S and pos_encoding.shape[1] == d_model

    scale = float(d_model) ** 0.5
    # Fold scale into the weight and (scale * bias) into the positional slab.
    w_scaled = (weight_t * scale).astype(jnp.float32)                       # (d_in, d_model)
    pe_const = (pos_encoding[:S, :] + bias[None, :] * scale).astype(jnp.float32)  # (S, d_model)

    tile_s = _choose_row_tile(S)
    grid = (B, pl.cdiv(S, tile_s))

    # If the downstream consumer is bf16, out_shape dtype could be bfloat16
    # (math stays f32; only the final store casts) to halve store/writeback cost.
    return pl.pallas_call(
        _pos_embed_kernel,
        out_shape=jax.ShapeDtypeStruct((B, S, d_model), x.dtype),
        grid=grid,
        in_specs=[
            pl.BlockSpec((pl.Squeezed(), tile_s, d_in), lambda b, s: (b, s, 0)),   # x
            pl.BlockSpec((d_in, d_model), lambda b, s: (0, 0)),                    # w_scaled
            pl.BlockSpec((tile_s, d_model), lambda b, s: (s, 0)),                  # pe_const
        ],
        out_specs=pl.BlockSpec((pl.Squeezed(), tile_s, d_model), lambda b, s: (b, s, 0)),
        compiler_params=pltpu.CompilerParams(
            dimension_semantics=("parallel", "parallel")),
    )(x, w_scaled, pe_const)


if __name__ == "__main__":
    # Small shapes consistent with the module: input_dim=1, d_model=256.
    B, S, d_in, d_model, max_len = 2, 16, 1, 256, 32

    key = jax.random.PRNGKey(0)
    kx, kw, kb = jax.random.split(key, 3)

    x = jax.random.normal(kx, (B, S, d_in), dtype=jnp.float32)
    # weight stored as (d_in, d_model) == PyTorch nn.Linear weight.T
    weight_t = jax.random.normal(kw, (d_in, d_model), dtype=jnp.float32)
    bias = 0.1 * jax.random.normal(kb, (d_model,), dtype=jnp.float32)
    pos_enc = positional_encoding(max_len, d_model)

    fwd = jax.jit(positional_embedding_forward)
    y = fwd(x, weight_t, bias, pos_enc)
    y = jax.block_until_ready(y)

    # Pure-JAX reference of the exact PyTorch semantics.
    scale = float(d_model) ** 0.5
    y_ref = (jnp.einsum("bsi,id->bsd", x, weight_t) + bias[None, None, :]) * scale \
            + pos_enc[:S, :][None, :, :]

    assert y.shape == (B, S, d_model)
    assert jnp.allclose(y, y_ref, atol=1e-4, rtol=1e-5)

    print("KERNEL_OK")
</pallas_src>

<mosaic_0001>
module attributes {stable_mosaic.version = 11 : i64} {
  func.func @_pos_embed_kernel(%arg0: i32, %arg1: i32, %arg2: memref<1x16x1xf32, #tpu.memory_space<vmem>>, %arg3: memref<1x256xf32, #tpu.memory_space<vmem>>, %arg4: memref<16x256xf32, #tpu.memory_space<vmem>>, %arg5: memref<1x16x256xf32, #tpu.memory_space<vmem>>) attributes {dimension_semantics = [#tpu.dimension_semantics<parallel>, #tpu.dimension_semantics<parallel>], iteration_bounds = array<i64: 2, 1>, scalar_prefetch = 0 : i64, scratch_operands = 0 : i64, tpu.core_type = #tpu.core_type<tc>, window_params = [{transform_indices = @transform_0, window_bounds = array<i64: 1, 16, 1>}, {pipeline_mode = #tpu.pipeline_mode<synchronous>, transform_indices = @transform_1, window_bounds = array<i64: 1, 256>}, {transform_indices = @transform_2, window_bounds = array<i64: 16, 256>}, {transform_indices = @transform_3, window_bounds = array<i64: 1, 16, 256>}]} {
    %c0 = arith.constant 0 : index
    %c0_0 = arith.constant 0 : index
    %c0_1 = arith.constant 0 : index
    %0 = vector.load %arg2[%c0, %c0_0, %c0_1] : memref<1x16x1xf32, #tpu.memory_space<vmem>>, vector<1x16x1xf32>
    %1 = vector.shape_cast %0 : vector<1x16x1xf32> to vector<16x1xf32>
    %c0_2 = arith.constant 0 : index
    %c0_3 = arith.constant 0 : index
    %2 = vector.load %arg3[%c0_2, %c0_3] : memref<1x256xf32, #tpu.memory_space<vmem>>, vector<1x256xf32>
    %3 = vector.broadcast %1 : vector<16x1xf32> to vector<16x256xf32>
    %4 = vector.broadcast %2 : vector<1x256xf32> to vector<16x256xf32>
    %5 = arith.mulf %3, %4 : vector<16x256xf32>
    %c0_4 = arith.constant 0 : index
    %c0_5 = arith.constant 0 : index
    %6 = vector.load %arg4[%c0_4, %c0_5] : memref<16x256xf32, #tpu.memory_space<vmem>>, vector<16x256xf32>
    %7 = arith.addf %5, %6 : vector<16x256xf32>
    %c0_6 = arith.constant 0 : index
    %c0_7 = arith.constant 0 : index
    %c0_8 = arith.constant 0 : index
    %8 = vector.load %arg5[%c0_6, %c0_7, %c0_8] : memref<1x16x256xf32, #tpu.memory_space<vmem>>, vector<1x16x256xf32>
    %9 = vector.shape_cast %8 : vector<1x16x256xf32> to vector<16x256xf32>
    %10 = vector.shape_cast %7 : vector<16x256xf32> to vector<1x16x256xf32>
    tpu.vector_store %arg5[%c0_6, %c0_7, %c0_8], %10 {strides = array<i32>} : memref<1x16x256xf32, #tpu.memory_space<vmem>>, vector<1x16x256xf32>,
    return
  }
  func.func @transform_0(%arg0: i32, %arg1: i32) -> (i32, i32, i32) {
    %c0_i32 = arith.constant 0 : i32
    %c0_i32_0 = arith.constant 0 : i32
    return %arg0, %arg1, %c0_i32 : i32, i32, i32
  }
  func.func @transform_1(%arg0: i32, %arg1: i32) -> (i32, i32) {
    %c0_i32 = arith.constant 0 : i32
    %c0_i32_0 = arith.constant 0 : i32
    %c0_i32_1 = arith.constant 0 : i32
    return %c0_i32, %c0_i32_0 : i32, i32
  }
  func.func @transform_2(%arg0: i32, %arg1: i32) -> (i32, i32) {
    %c0_i32 = arith.constant 0 : i32
    %c0_i32_0 = arith.constant 0 : i32
    return %arg1, %c0_i32 : i32, i32
  }
  func.func @transform_3(%arg0: i32, %arg1: i32) -> (i32, i32, i32) {
    %c0_i32 = arith.constant 0 : i32
    %c0_i32_0 = arith.constant 0 : i32
    return %arg0, %arg1, %c0_i32 : i32, i32, i32
  }
}

</mosaic_0001>

<llo_original>
// kernel: positional_embedding_forward.1
$region0: #{positional_embedding_forward.1}
  #allocation0 [shape = 'u32[]', space=smem, size = 0x4, offset = 0x4, fixed_abs, tag = 'smem constant byte address 0x4 - core index']
  #allocation1 [shape = 'u32[144,128]{1,0:T(1,128)}', space=vmem, size = 0x12000, scoped, tag = 'internal scratch']
  %s0 = inlined_call_operand.vmem [shape: f32[2,16,1], index: 0, kind: input, shape index: {}]
  %s1 = inlined_call_operand.vmem [shape: f32[1,256], index: 1, kind: input, shape index: {}]
  %s2 = inlined_call_operand.vmem [shape: f32[16,256], index: 2, kind: input, shape index: {}]
  %s3 = inlined_call_operand.hbm [shape: f32[2,16,256], index: 3, kind: output, shape index: {}]
  %s4 = sld [smem:[#allocation0]]
  $region45: #{positional_embedding_forward.1} parent=0
    _
  %s6 = ssub.s32 1, %s4
  %s7 = scalar_select 0, %s6, %s4
  $region1: #{positional_embedding_forward.1} parent=0
    #allocation2 [shape = 'u8[32768]{0}', space=vmem, size = 0x8000, scoped, tag = 'output window, operand 0']
    #allocation3 [shape = 's32[2]{0}', space=sflag, size = 0x8, scoped, tag = 'scoped memory for positional_embedding_forward.1']
    %8 = vsyncpa [#allocation3], 0
    %s9 = scalar_lea.sflag [#allocation3], 1
    %10 = vsyncpa %s9, 0
    loop: start=0, step=1, limit=4
    $region2: #{positional_embedding_forward.1} parent=1 // loop_pre_header
      _
    $region3: #{positional_embedding_forward.1} parent=1 // loop_header
      %s12 = sphi 0, %s16
      %p13 = scmp.ge.s32.totalorder %s12, 4
      %s19 = sphi 0, %s31
      %s20 = sphi 0, %s27
      %s21 = sphi 0, %s19
      %s22 = sphi 0, %s20
      %s23 = sphi 0, %s21
      %s24 = sphi 0, %s22
      %s36 = sphi 0, %s38
      %s39 = sphi 0, %s36
      %s40 = sphi 0, %s39
      %s56 = sphi 0, %s40
      %s60 = sphi 0, %s60
      %s62 = sphi 0, %s60
      %s63 = sphi 0, %s62
      %s77 = sphi 0, %s63
      %s83 = sphi 0, %s85
      %s86 = sphi 0, %s83
      %s87 = sphi 0, %s86
      %s103 = sphi 0, %s87
      %s111 = sphi 0, %s113
      %s114 = sphi 0, %s111
      %s115 = sphi 0, %s114
      %s131 = sphi 0, %s115
    $region4: #{positional_embedding_forward.1} parent=1 // loop_header_branch
      %15 = sbr.rel (%p13) target = $region8
    $region5: #{positional_embedding_forward.1} parent=1 // loop_body
      %s17 = ssub.s32 %s12, 1
      %s18 = ssub.s32 %s12, 2
      %s25 = sadd.s32 1, %s20
      %p26 = scmp.ge.s32.totalorder %s25, 1
      %s27 = scalar_select %p26, 0, %s25
      %s28 = sadd.s32 1, %s19
      %s29 = scalar_select %p26, %s28, %s19
      %p30 = scmp.ge.s32.totalorder %s29, 2
      %s31 = scalar_select %p30, 0, %s29
      %s32 = ssub.s32 %s19, %s31
      %s33 = ssub.s32 %s20, %s27
      %s34 = sor.u32 %s32, %s33
      %p35 = scmp.eq.s32.totalorder %s34, 0
      %s37 = sadd.s32 %s36, 1
      %s38 = scalar_select %p35, %s36, %s37
      %p41 = pneg %p35
      %p42 = scmp.eq.s32.totalorder %s12, 1
      %p43 = por %p41, %p42
      %p44 = scmp.ne.s32.totalorder %s36, %s39
      %p45 = scmp.eq.s32.totalorder %s12, 0
      %p46 = por %p44, %p45
      %p47 = scmp.ne.s32.totalorder %s36, %s39
      %p48 = scmp.eq.s32.totalorder %s17, 1
      %p49 = por %p47, %p48
      %p50 = scmp.ne.s32.totalorder %s39, %s40
      %p51 = scmp.eq.s32.totalorder %s17, 0
      %p52 = por %p50, %p51
      %p53 = scmp.ne.s32.totalorder %s39, %s40
      %p54 = scmp.eq.s32.totalorder %s18, 1
      %p55 = por %p53, %p54
      %p57 = scmp.ne.s32.totalorder %s40, %s56
      %p58 = scmp.eq.s32.totalorder %s18, 0
      %p59 = por %p57, %p58
      %s61 = sadd.s32 %s60, 1
      %p64 = scmp.eq.s32.totalorder %s12, 1
      %p65 = scmp.ne.s32.totalorder %s60, %s62
      %p66 = scmp.eq.s32.totalorder %s12, 0
      %p67 = por %p65, %p66
      %p68 = scmp.ne.s32.totalorder %s60, %s62
      %p69 = scmp.eq.s32.totalorder %s17, 1
      %p70 = por %p68, %p69
      %p71 = scmp.ne.s32.totalorder %s62, %s63
      %p72 = scmp.eq.s32.totalorder %s17, 0
      %p73 = por %p71, %p72
      %p74 = scmp.ne.s32.totalorder %s62, %s63
      %p75 = scmp.eq.s32.totalorder %s18, 1
      %p76 = por %p74, %p75
      %p78 = scmp.ne.s32.totalorder %s63, %s77
      %p79 = scmp.eq.s32.totalorder %s18, 0
      %p80 = por %p78, %p79
      %s81 = ssub.s32 %s20, %s27
      %p82 = scmp.eq.s32.totalorder %s81, 0
      %s84 = sadd.s32 %s83, 1
      %s85 = scalar_select %p82, %s83, %s84
      %p88 = pneg %p82
      %p89 = scmp.eq.s32.totalorder %s12, 1
      %p90 = por %p88, %p89
      %p91 = scmp.ne.s32.totalorder %s83, %s86
      %p92 = scmp.eq.s32.totalorder %s12, 0
      %p93 = por %p91, %p92
      %p94 = scmp.ne.s32.totalorder %s83, %s86
      %p95 = scmp.eq.s32.totalorder %s17, 1
      %p96 = por %p94, %p95
      %p97 = scmp.ne.s32.totalorder %s86, %s87
      %p98 = scmp.eq.s32.totalorder %s17, 0
      %p99 = por %p97, %p98
      %p100 = scmp.ne.s32.totalorder %s86, %s87
      %p101 = scmp.eq.s32.totalorder %s18, 1
      %p102 = por %p100, %p101
      %p104 = scmp.ne.s32.totalorder %s87, %s103
      %p105 = scmp.eq.s32.totalorder %s18, 0
      %p106 = por %p104, %p105
      %s107 = ssub.s32 %s19, %s31
      %s108 = ssub.s32 %s20, %s27
      %s109 = sor.u32 %s107, %s108
      %p110 = scmp.eq.s32.totalorder %s109, 0
      %s112 = sadd.s32 %s111, 1
      %s113 = scalar_select %p110, %s111, %s112
      %p116 = pneg %p110
      %p117 = scmp.eq.s32.totalorder %s12, 1
      %p118 = por %p116, %p117
      %p119 = scmp.ne.s32.totalorder %s111, %s114
      %p120 = scmp.eq.s32.totalorder %s12, 0
      %p121 = por %p119, %p120
      %p122 = scmp.ne.s32.totalorder %s111, %s114
      %p123 = scmp.eq.s32.totalorder %s17, 1
      %p124 = por %p122, %p123
      %p125 = scmp.ne.s32.totalorder %s114, %s115
      %p126 = scmp.eq.s32.totalorder %s17, 0
      %p127 = por %p125, %p126
      %p128 = scmp.ne.s32.totalorder %s114, %s115
      %p129 = scmp.eq.s32.totalorder %s18, 1
      %p130 = por %p128, %p129
      %p132 = scmp.ne.s32.totalorder %s115, %s131
      %p133 = scmp.eq.s32.totalorder %s18, 0
      %p134 = por %p132, %p133
      %p135 = scmp.le.s32.totalorder 1, %s12
      %p136 = scmp.lt.s32.totalorder %s12, 3
      %p137 = pnand %p135, %p136
      %p138 = pneg %p137
      // Predicated region
      $region9: #{positional_embedding_forward.1} parent=5 // pred_check
        _
      $region10: #{positional_embedding_forward.1} parent=5 // pred_check_branch
        %140 = sbr.rel (%p137) target = $region12
      $region11: #{positional_embedding_forward.1} parent=5 // pred_region
        %s141 = ssub.s32 %s12, 1
        // Predicated region
        $region13: #{positional_embedding_forward.1} parent=11 // pred_check
          %p142 = pneg %p73
        $region14: #{positional_embedding_forward.1} parent=11 // pred_check_branch
          %144 = sbr.rel (%p142) target = $region16
        $region15: #{positional_embedding_forward.1} parent=11 // pred_region
          _
        $region16: #{positional_embedding_forward.1} parent=11 // pred_fallthru
          _
        // Predicated region
        $region17: #{positional_embedding_forward.1} parent=11 // pred_check
          %p145 = pneg %p99
        $region18: #{positional_embedding_forward.1} parent=11 // pred_check_branch
          %147 = sbr.rel (%p145) target = $region20
        $region19: #{positional_embedding_forward.1} parent=11 // pred_region
          %s148 = smul.u32 2, %s22
          %p149 = scmp.lt.s32.totalorder %s148, 1
          %s150 = scalar_select %p149, %s148, 1
          %s151 = smul.addr %s150, 2
          %s152 = smul.addr %s151, 8
          %s153 = scalar_lea.vmem %s2, %s152
          %s154 = smul.u32 2, %s22
        $region20: #{positional_embedding_forward.1} parent=11 // pred_fallthru
          _
      $region12: #{positional_embedding_forward.1} parent=5 // pred_fallthru
        _
      %p155 = scmp.lt.s32.totalorder %s12, 2
      // Predicated region
      $region21: #{positional_embedding_forward.1} parent=5 // pred_check
        %p156 = pneg %p155
      $region22: #{positional_embedding_forward.1} parent=5 // pred_check_branch
        %158 = sbr.rel (%p156) target = $region24
      $region23: #{positional_embedding_forward.1} parent=5 // pred_region
        // Predicated region
        $region25: #{positional_embedding_forward.1} parent=23 // pred_check
          %p159 = pneg %p46
        $region26: #{positional_embedding_forward.1} parent=23 // pred_check_branch
          %161 = sbr.rel (%p159) target = $region28
        $region27: #{positional_embedding_forward.1} parent=23 // pred_region
          %s162 = smul.u32 2, %s20
          %p163 = scmp.lt.s32.totalorder %s19, 1
          %s164 = scalar_select %p163, %s19, 1
          %p165 = scmp.lt.s32.totalorder %s162, 1
          %s166 = scalar_select %p165, %s162, 1
          %s167 = smul.addr %s164, 2
          %s168 = sadd.s32 %s166, %s167
          %s169 = smul.addr %s168, 8
          %s170 = scalar_lea.vmem %s0, %s169
          %s171 = smul.u32 2, %s20
        $region28: #{positional_embedding_forward.1} parent=23 // pred_fallthru
          _
      $region24: #{positional_embedding_forward.1} parent=5 // pred_fallthru
        _
      %p172 = scmp.le.s32.totalorder 1, %s12
      %p173 = scmp.lt.s32.totalorder %s12, 3
      %p174 = pnand %p172, %p173
      %p175 = pneg %p174
      // Predicated region
      $region29: #{positional_embedding_forward.1} parent=5 // pred_check
        _
      $region30: #{positional_embedding_forward.1} parent=5 // pred_check_branch
        %177 = sbr.rel (%p174) target = $region32
      $region31: #{positional_embedding_forward.1} parent=5 // pred_region
        %s178 = ssub.s32 %s12, 1
        %s179 = smul.u32 2, %s22
        %p180 = scmp.lt.s32.totalorder %s21, 1
        %s181 = scalar_select %p180, %s21, 1
        %p182 = scmp.lt.s32.totalorder %s179, 1
        %s183 = scalar_select %p182, %s179, 1
        %s184 = smul.addr %s181, 2
        %s185 = sadd.s32 %s183, %s184
        %s186 = smul.addr %s185, 8
        %s187 = scalar_lea.vmem %s0, %s186
        %p188 = pneg %p52
        %p189 = pneg %p49
        %p190 = pneg %p73
        %p191 = pneg %p70
        %s192 = smul.u32 2, %s22
        %p193 = scmp.lt.s32.totalorder %s192, 1
        %s194 = scalar_select %p193, %s192, 1
        %s195 = smul.addr %s194, 2
        %s196 = smul.addr %s195, 8
        %s197 = scalar_lea.vmem %s2, %s196
        %p198 = pneg %p99
        %p199 = pneg %p96
        %p200 = pneg %p127
        %p201 = pneg %p124
        %s202 = sand.u32 %s114, 1
        %s203 = scalar_lea.sflag [#allocation3], %s202
        %s204 = sand.u32 %s114, 1
        %s205 = smul.addr %s204, 32
        %s206 = scalar_lea.vmem [#allocation2], %s205
        %s207 = smul.u32 2, %s22
        %p208 = scmp.lt.s32.totalorder %s21, 1
        %s209 = scalar_select %p208, %s21, 1
        %p210 = scmp.lt.s32.totalorder %s207, 1
        %s211 = scalar_select %p210, %s207, 1
        %s212 = smul.addr %s209, 2
        %s213 = sadd.s32 %s211, %s212
        %s214 = smul.addr %s213, 8
        %s215 = scalar_lea.vmem %s0, %s214
        %s216 = smul.u32 2, %s22
        %s217 = smul.u32 2, %s22
        %p218 = scmp.lt.s32.totalorder %s217, 1
        %s219 = scalar_select %p218, %s217, 1
        %s220 = smul.addr %s219, 2
        %s221 = smul.addr %s220, 8
        %s222 = scalar_lea.vmem %s2, %s221
        %s223 = smul.u32 2, %s22
        %s224 = smul.u32 2, %s22
        %v225 = vld [vmem:[%s215] sm:$0xff]
        %v226 = vld [vmem:[%s215 + $0x8] sm:$0xff]
        %v227 = vld [vmem:[%s1] sm:$0x3]
        %229 = vset.pattern.permute.xlu0 0
        %230 = vperm.xlu0 %229, %v225
        %v231 = vpop.permute.xlu0 %230
        %234 = vset.pattern.permute.xlu0 0
        %235 = vperm.xlu0 %234, %v226
        %v236 = vpop.permute.xlu0 %235
        %v239 = vlaneseq
        %v240 = vshrl.u32 %v239, 7
        %v241 = vsub.s32 0, %v240
        %v242 = vrot.slane %v227, %v241
        %v243 = vlaneseq
        %v244 = vshrl.u32 %v243, 7
        %v245 = vsub.s32 1, %v244
        %v246 = vrot.slane %v227, %v245
        %v249 = vmul.f32 %v231, %v242
        %v250 = vmul.f32 %v231, %v246
        %v251 = vmul.f32 %v236, %v242
        %v252 = vmul.f32 %v236, %v246
        %v253 = vld [vmem:[%s222] sm:$0xff]
        %v254 = vld [vmem:[%s222 + $0x8] sm:$0xff]
        %v255 = vld [vmem:[%s222 + $0x10] sm:$0xff]
        %v256 = vld [vmem:[%s222 + $0x18] sm:$0xff]
        %v257 = vadd.f32 %v249, %v253
        %v258 = vadd.f32 %v250, %v254
        %v259 = vadd.f32 %v251, %v255
        %v260 = vadd.f32 %v252, %v256
        %261 = vst [vmem:[%s206] sm:$0xff] %v257
        %262 = vst [vmem:[%s206 + $0x8] sm:$0xff] %v258
        %263 = vst [vmem:[%s206 + $0x10] sm:$0xff] %v259
        %264 = vst [vmem:[%s206 + $0x18] sm:$0xff] %v260
        %s265 = sand.u32 %s114, 1
        %s266 = scalar_lea.sflag [#allocation3], %s265
        %s267 = sand.u32 %s114, 1
        %s268 = smul.addr %s267, 32
        %s269 = scalar_lea.vmem [#allocation2], %s268
        // Predicated region
        $region33: #{positional_embedding_forward.1} parent=31 // pred_check
          %p270 = pneg %p124
        $region34: #{positional_embedding_forward.1} parent=31 // pred_check_branch
          %272 = sbr.rel (%p270) target = $region36
        $region35: #{positional_embedding_forward.1} parent=31 // pred_region
          %s273 = smul.u32 2, %s22
          %s275 = ssub.s32 512, 512
          %276 = vsyncadd %s266, %s275
          %s277 = smul.addr %s273, 2
          %s278 = smul.addr %s21, 4
          %s279 = sadd.s32 %s277, %s278
          %s280 = smul.addr %s279, 128
          %s281 = scalar_lea.hbm %s3, %s280
          %s282 = sshll.u32 %s269, 4
          %s283 = int_to_ptr.vmem [resolvable:$true] %s282
          %288 = dma.vmem_to_hbm [thread:$0]  %s283, 512, %s281, %s266, 256, 256, 16
        $region36: #{positional_embedding_forward.1} parent=31 // pred_fallthru
          _
      $region32: #{positional_embedding_forward.1} parent=5 // pred_fallthru
        _
      %p289 = scmp.le.s32.totalorder 2, %s12
      // Predicated region
      $region37: #{positional_embedding_forward.1} parent=5 // pred_check
        %p290 = pneg %p289
      $region38: #{positional_embedding_forward.1} parent=5 // pred_check_branch
        %292 = sbr.rel (%p290) target = $region40
      $region39: #{positional_embedding_forward.1} parent=5 // pred_region
        %s293 = ssub.s32 %s12, 2
        // Predicated region
        $region41: #{positional_embedding_forward.1} parent=39 // pred_check
          %p294 = pneg %p130
        $region42: #{positional_embedding_forward.1} parent=39 // pred_check_branch
          %296 = sbr.rel (%p294) target = $region44
        $region43: #{positional_embedding_forward.1} parent=39 // pred_region
          %s297 = sand.u32 %s115, 1
          %s298 = scalar_lea.sflag [#allocation3], %s297
          %s299 = sand.u32 %s115, 1
          %s300 = smul.addr %s299, 32
          %s301 = scalar_lea.vmem [#allocation2], %s300
          %302 = dma.done %s298, 512
        $region44: #{positional_embedding_forward.1} parent=39 // pred_fallthru
          _
      $region40: #{positional_embedding_forward.1} parent=5 // pred_fallthru
        _
    $region6: #{positional_embedding_forward.1} parent=1 // loop_footer
      %s16 = sadd.s32 1, %s12
    $region7: #{positional_embedding_forward.1} parent=1 // loop_footer_branch
      %11 = sbr.rel target = $region3
    $region8: #{positional_embedding_forward.1} parent=1 // loop_exit
      _
    %303 = vsyncpa [#allocation3], 1
    %s304 = scalar_lea.sflag [#allocation3], 1
    %305 = vsyncpa %s304, 1

</llo_original>
